<compile_context>
chip_gen: v5e
topology: v5e:2x2
jax: 0.10.0
libtpu: 0.0.40
codegen_flags: <defaults>
</compile_context>

<pallas_src>
import functools

import jax
import jax.numpy as jnp
from jax.experimental import pallas as pl
from jax.experimental.pallas import tpu as pltpu


def _rmsnorm_kernel(x_ref, w_ref, o_ref, *, eps, inv_d):
    # x_ref: (tm, D)   w_ref: (1, D)  (already in x.dtype)   o_ref: (tm, D)
    x = x_ref[...].astype(jnp.float32)                      # torch: x.float()
    ss = jnp.sum(x * x, axis=-1, keepdims=True)             # XLU cross-lane reduce
    inv = jax.lax.rsqrt(ss * inv_d + eps)                   # EUP rsqrt (free slot)
    normed = (x * inv).astype(o_ref.dtype)                  # torch: .type_as(x)
    o_ref[...] = normed * w_ref[...]                        # single vmul epilogue


def _cdiv(a, b):
    return -(-a // b)


def _round_up(a, b):
    return _cdiv(a, b) * b


def _choose_tm(T, D, itemsize):
    """Token-tile size from a VMEM byte budget, sublane-aligned, even tile count."""
    sub = max(8, 32 // itemsize)          # packed sublanes: 8 f32, 16 bf16, 32 int8/fp8
    if T <= sub:
        return T                          # full-dim block is always a legal block shape
    budget = 2 * 1024 * 1024              # ~2 MiB per x block
    tm = max(sub, (budget // (D * itemsize)) // sub * sub)
    tm = min(tm, _round_up(T, sub))       # never more than one tile's worth of rows
    n = _cdiv(T, tm)
    # v7x megacore: prefer an even tile count (>= 2) so both TensorCores stay busy.
    if n < 2 or n % 2:
        target_n = 2 if n < 2 else n + 1
        tm_even = max(sub, _round_up(_cdiv(T, target_n), sub))
        n_even = _cdiv(T, tm_even)
        if n_even >= 2 and n_even % 2 == 0:
            tm = tm_even
    return tm


def rms_norm(x, weight, *, eps=1e-6, tm=None):
    """x: (..., dim); weight: (dim,). Matches RMSNorm.forward semantics."""
    orig_shape = x.shape
    D = orig_shape[-1]
    x2d = x.reshape(-1, D)
    T = x2d.shape[0]
    itemsize = jnp.dtype(x.dtype).itemsize
    # NOTE: weight is cast to x.dtype (one-time, wrapper-side). Matches torch exactly
    # when weight.dtype == x.dtype (the common case); for mixed dtypes torch would
    # promote the output to the wider dtype instead.
    w2d = weight.astype(x.dtype).reshape(1, D)

    if tm is None:
        tm = _choose_tm(T, D, itemsize)

    grid = (_cdiv(T, tm),)
    cost = pl.CostEstimate(
        flops=4 * T * D,                  # square, reduce, scale, weight-mul
        transcendentals=T,                # one rsqrt per row
        bytes_accessed=2 * T * D * itemsize + D * itemsize,
    )

    out = pl.pallas_call(
        functools.partial(_rmsnorm_kernel, eps=eps, inv_d=1.0 / D),
        out_shape=jax.ShapeDtypeStruct((T, D), x.dtype),
        grid_spec=pltpu.PrefetchScalarGridSpec(
            num_scalar_prefetch=0,
            grid=grid,
            in_specs=[
                pl.BlockSpec((tm, D), lambda i: (i, 0)),   # x tile: lane-dense, full D
                pl.BlockSpec((1, D), lambda i: (0, 0)),    # weight: resident constant block
            ],
            out_specs=pl.BlockSpec((tm, D), lambda i: (i, 0)),
        ),
        compiler_params=pltpu.CompilerParams(
            dimension_semantics=("parallel",),
            vmem_limit_bytes=32 * 1024 * 1024,
        ),
        cost_estimate=cost,
    )(x2d, w2d)

    return out.reshape(orig_shape)


def _reference(x, weight, eps):
    xf = x.astype(jnp.float32)
    normed = xf * jax.lax.rsqrt(jnp.mean(xf * xf, axis=-1, keepdims=True) + eps)
    return normed.astype(x.dtype) * weight


if __name__ == "__main__":
    batch, seq, dim = 2, 8, 256   # dim multiple of 128 -> unmasked lane-dense stores

    key = jax.random.PRNGKey(0)
    kx, kw = jax.random.split(key, 2)

    x = jax.random.normal(kx, (batch, seq, dim), dtype=jnp.float32)
    # module inits weight to ones; perturb deterministically so the scale path is exercised
    weight = 1.0 + 0.1 * jax.random.normal(kw, (dim,), dtype=jnp.float32)

    out = rms_norm(x, weight, eps=1e-6)   # T=16 -> tm=8 -> 2 token tiles (parallel axis)
    out = jax.block_until_ready(out)

    ref = _reference(x, weight, 1e-6)
    assert out.shape == (batch, seq, dim)
    assert jnp.allclose(out, ref, atol=1e-5, rtol=1e-5), "mismatch vs reference"

    print("KERNEL_OK")
</pallas_src>

<mosaic_0001>
module attributes {stable_mosaic.version = 11 : i64} {
  func.func @_rmsnorm_kernel(%arg0: i32, %arg1: memref<8x256xf32, #tpu.memory_space<vmem>>, %arg2: memref<1x256xf32, #tpu.memory_space<vmem>>, %arg3: memref<8x256xf32, #tpu.memory_space<vmem>>) attributes {dimension_semantics = [#tpu.dimension_semantics<parallel>], iteration_bounds = array<i64: 2>, scalar_prefetch = 0 : i64, scratch_operands = 0 : i64, tpu.core_type = #tpu.core_type<tc>, window_params = [{transform_indices = @transform_0, window_bounds = array<i64: 8, 256>}, {pipeline_mode = #tpu.pipeline_mode<synchronous>, transform_indices = @transform_1, window_bounds = array<i64: 1, 256>}, {transform_indices = @transform_2, window_bounds = array<i64: 8, 256>}]} {
    %c0 = arith.constant 0 : index
    %c0_0 = arith.constant 0 : index
    %0 = vector.load %arg1[%c0, %c0_0] : memref<8x256xf32, #tpu.memory_space<vmem>>, vector<8x256xf32>
    %1 = arith.mulf %0, %0 : vector<8x256xf32>
    %cst = arith.constant dense<0.000000e+00> : vector<8xf32>
    %2 = vector.multi_reduction <add>, %1, %cst [1] : vector<8x256xf32> to vector<8xf32>
    %3 = vector.shape_cast %2 : vector<8xf32> to vector<8x1xf32>
    %cst_1 = arith.constant 3.906250e-03 : f32
    %4 = vector.broadcast %cst_1 : f32 to vector<8x1xf32>
    %5 = arith.mulf %3, %4 : vector<8x1xf32>
    %cst_2 = arith.constant 9.99999997E-7 : f32
    %6 = vector.broadcast %cst_2 : f32 to vector<8x1xf32>
    %7 = arith.addf %5, %6 : vector<8x1xf32>
    %8 = math.rsqrt %7 : vector<8x1xf32>
    %9 = vector.broadcast %8 : vector<8x1xf32> to vector<8x256xf32>
    %10 = arith.mulf %0, %9 : vector<8x256xf32>
    %c0_3 = arith.constant 0 : index
    %c0_4 = arith.constant 0 : index
    %11 = vector.load %arg2[%c0_3, %c0_4] : memref<1x256xf32, #tpu.memory_space<vmem>>, vector<1x256xf32>
    %12 = vector.broadcast %11 : vector<1x256xf32> to vector<8x256xf32>
    %13 = arith.mulf %10, %12 : vector<8x256xf32>
    %c0_5 = arith.constant 0 : index
    %c0_6 = arith.constant 0 : index
    %14 = vector.load %arg3[%c0_5, %c0_6] : memref<8x256xf32, #tpu.memory_space<vmem>>, vector<8x256xf32>
    tpu.vector_store %arg3[%c0_5, %c0_6], %13 {strides = array<i32>} : memref<8x256xf32, #tpu.memory_space<vmem>>, vector<8x256xf32>,
    return
  }
  func.func @transform_0(%arg0: i32) -> (i32, i32) {
    %c0_i32 = arith.constant 0 : i32
    %c0_i32_0 = arith.constant 0 : i32
    return %arg0, %c0_i32 : i32, i32
  }
  func.func @transform_1(%arg0: i32) -> (i32, i32) {
    %c0_i32 = arith.constant 0 : i32
    %c0_i32_0 = arith.constant 0 : i32
    %c0_i32_1 = arith.constant 0 : i32
    return %c0_i32, %c0_i32_0 : i32, i32
  }
  func.func @transform_2(%arg0: i32) -> (i32, i32) {
    %c0_i32 = arith.constant 0 : i32
    %c0_i32_0 = arith.constant 0 : i32
    return %arg0, %c0_i32 : i32, i32
  }
}

</mosaic_0001>

<llo_original>
// kernel: tpu_custom_call.1
$region0: #{tpu_custom_call.1}
  #allocation0 [shape = 'u32[]', space=smem, size = 0x4, offset = 0x4, fixed_abs, tag = 'smem constant byte address 0x4 - core index']
  #allocation1 [shape = 'u32[72,128]{1,0:T(1,128)}', space=vmem, size = 0x9000, scoped, tag = 'internal scratch']
  %s0 = inlined_call_operand.hbm [shape: f32[16,256], index: 0, kind: input, shape index: {}]
  %s1 = inlined_call_operand.hbm [shape: f32[1,256], index: 1, kind: input, shape index: {}]
  %s2 = inlined_call_operand.hbm [shape: f32[16,256], index: 2, kind: output, shape index: {}]
  %s3 = sld [smem:[#allocation0]]
  $region49: #{tpu_custom_call.1} parent=0
    _
  %s5 = ssub.s32 1, %s3
  %s6 = scalar_select 0, %s5, %s3
  $region1: #{tpu_custom_call.1} parent=0
    #allocation2 [shape = 'u8[16384]{0}', space=vmem, size = 0x4000, scoped, tag = 'input window, operand 0']
    #allocation3 [shape = 's32[2]{0}', space=sflag, size = 0x8, scoped, tag = 'scoped memory for tpu_custom_call.1']
    #allocation4 [shape = 's32[2]{0}', space=sflag, size = 0x8, scoped, tag = 'scoped memory for tpu_custom_call.1']
    #allocation5 [shape = 'u8[1024]{0}', space=vmem, size = 0x400, scoped, tag = 'input window, operand 1, single buffered']
    #allocation6 [shape = 's32[1]{0}', space=sflag, size = 0x4, scoped, tag = 'scoped memory for tpu_custom_call.1']
    #allocation7 [shape = 'u8[16384]{0}', space=vmem, size = 0x4000, scoped, tag = 'output window, operand 0']
    %7 = vsyncpa [#allocation3], 0
    %s8 = scalar_lea.sflag [#allocation3], 1
    %9 = vsyncpa %s8, 0
    %10 = vsyncpa [#allocation6], 0
    %11 = vsyncpa [#allocation4], 0
    %s12 = scalar_lea.sflag [#allocation4], 1
    %13 = vsyncpa %s12, 0
    loop: start=0, step=1, limit=4
    $region2: #{tpu_custom_call.1} parent=1 // loop_pre_header
      _
    $region3: #{tpu_custom_call.1} parent=1 // loop_header
      %s15 = sphi 0, %s19
      %p16 = scmp.ge.s32.totalorder %s15, 4
      %s25 = sphi 0, %s27
      %s28 = sphi 0, %s25
      %s29 = sphi 0, %s28
      %s45 = sphi 0, %s29
      %s49 = sphi 0, %s49
      %s51 = sphi 0, %s49
      %s52 = sphi 0, %s51
      %s66 = sphi 0, %s52
      %s72 = sphi 0, %s74
      %s75 = sphi 0, %s72
      %s76 = sphi 0, %s75
      %s92 = sphi 0, %s76
    $region4: #{tpu_custom_call.1} parent=1 // loop_header_branch
      %18 = sbr.rel (%p16) target = $region8
    $region5: #{tpu_custom_call.1} parent=1 // loop_body
      %s20 = ssub.s32 %s15, 1
      %s21 = ssub.s32 %s15, 2
      %s22 = sadd.s32 %s15, 1
      %s23 = ssub.s32 %s15, %s22
      %p24 = scmp.eq.s32.totalorder %s23, 0
      %s26 = sadd.s32 %s25, 1
      %s27 = scalar_select %p24, %s25, %s26
      %p30 = pneg %p24
      %p31 = scmp.eq.s32.totalorder %s15, 1
      %p32 = por %p30, %p31
      %p33 = scmp.ne.s32.totalorder %s25, %s28
      %p34 = scmp.eq.s32.totalorder %s15, 0
      %p35 = por %p33, %p34
      %p36 = scmp.ne.s32.totalorder %s25, %s28
      %p37 = scmp.eq.s32.totalorder %s20, 1
      %p38 = por %p36, %p37
      %p39 = scmp.ne.s32.totalorder %s28, %s29
      %p40 = scmp.eq.s32.totalorder %s20, 0
      %p41 = por %p39, %p40
      %p42 = scmp.ne.s32.totalorder %s28, %s29
      %p43 = scmp.eq.s32.totalorder %s21, 1
      %p44 = por %p42, %p43
      %p46 = scmp.ne.s32.totalorder %s29, %s45
      %p47 = scmp.eq.s32.totalorder %s21, 0
      %p48 = por %p46, %p47
      %s50 = sadd.s32 %s49, 1
      %p53 = scmp.eq.s32.totalorder %s15, 1
      %p54 = scmp.ne.s32.totalorder %s49, %s51
      %p55 = scmp.eq.s32.totalorder %s15, 0
      %p56 = por %p54, %p55
      %p57 = scmp.ne.s32.totalorder %s49, %s51
      %p58 = scmp.eq.s32.totalorder %s20, 1
      %p59 = por %p57, %p58
      %p60 = scmp.ne.s32.totalorder %s51, %s52
      %p61 = scmp.eq.s32.totalorder %s20, 0
      %p62 = por %p60, %p61
      %p63 = scmp.ne.s32.totalorder %s51, %s52
      %p64 = scmp.eq.s32.totalorder %s21, 1
      %p65 = por %p63, %p64
      %p67 = scmp.ne.s32.totalorder %s52, %s66
      %p68 = scmp.eq.s32.totalorder %s21, 0
      %p69 = por %p67, %p68
      %s70 = ssub.s32 %s15, %s22
      %p71 = scmp.eq.s32.totalorder %s70, 0
      %s73 = sadd.s32 %s72, 1
      %s74 = scalar_select %p71, %s72, %s73
      %p77 = pneg %p71
      %p78 = scmp.eq.s32.totalorder %s15, 1
      %p79 = por %p77, %p78
      %p80 = scmp.ne.s32.totalorder %s72, %s75
      %p81 = scmp.eq.s32.totalorder %s15, 0
      %p82 = por %p80, %p81
      %p83 = scmp.ne.s32.totalorder %s72, %s75
      %p84 = scmp.eq.s32.totalorder %s20, 1
      %p85 = por %p83, %p84
      %p86 = scmp.ne.s32.totalorder %s75, %s76
      %p87 = scmp.eq.s32.totalorder %s20, 0
      %p88 = por %p86, %p87
      %p89 = scmp.ne.s32.totalorder %s75, %s76
      %p90 = scmp.eq.s32.totalorder %s21, 1
      %p91 = por %p89, %p90
      %p93 = scmp.ne.s32.totalorder %s76, %s92
      %p94 = scmp.eq.s32.totalorder %s21, 0
      %p95 = por %p93, %p94
      %p96 = scmp.le.s32.totalorder 1, %s15
      %p97 = scmp.lt.s32.totalorder %s15, 3
      %p98 = pnand %p96, %p97
      %p99 = pneg %p98
      // Predicated region
      $region9: #{tpu_custom_call.1} parent=5 // pred_check
        _
      $region10: #{tpu_custom_call.1} parent=5 // pred_check_branch
        %101 = sbr.rel (%p98) target = $region12
      $region11: #{tpu_custom_call.1} parent=5 // pred_region
        %s102 = ssub.s32 %s15, 1
        // Predicated region
        $region13: #{tpu_custom_call.1} parent=11 // pred_check
          %p103 = pneg %p62
        $region14: #{tpu_custom_call.1} parent=11 // pred_check_branch
          %105 = sbr.rel (%p103) target = $region16
        $region15: #{tpu_custom_call.1} parent=11 // pred_region
          %107 = vsyncadd [#allocation6], 0
          %s109 = sshll.u32 %s1, 4
          %s110 = int_to_ptr.hbm [resolvable:$true] %s109
          %s111 = sshll.u32 [#allocation5], 4
          %s112 = int_to_ptr.vmem [resolvable:$true] %s111
          %114 = dma.hbm_to_vmem [thread:$0]  %s110, 32, %s112, [#allocation6]
        $region16: #{tpu_custom_call.1} parent=11 // pred_fallthru
          _
      $region12: #{tpu_custom_call.1} parent=5 // pred_fallthru
        _
      %p115 = scmp.lt.s32.totalorder %s15, 2
      // Predicated region
      $region17: #{tpu_custom_call.1} parent=5 // pred_check
        %p116 = pneg %p115
      $region18: #{tpu_custom_call.1} parent=5 // pred_check_branch
        %118 = sbr.rel (%p116) target = $region20
      $region19: #{tpu_custom_call.1} parent=5 // pred_region
        // Predicated region
        $region21: #{tpu_custom_call.1} parent=19 // pred_check
          %p119 = pneg %p35
        $region22: #{tpu_custom_call.1} parent=19 // pred_check_branch
          %121 = sbr.rel (%p119) target = $region24
        $region23: #{tpu_custom_call.1} parent=19 // pred_region
          %s122 = sand.u32 %s25, 1
          %s123 = scalar_lea.sflag [#allocation3], %s122
          %s124 = sand.u32 %s25, 1
          %s125 = smul.addr %s124, 16
          %s126 = scalar_lea.vmem [#allocation2], %s125
          %128 = vsyncadd %s123, 0
          %s129 = smul.addr %s15, 2
          %s130 = smul.addr %s129, 8
          %s131 = scalar_lea.hbm %s0, %s130
          %s133 = sshll.u32 %s131, 4
          %s134 = int_to_ptr.hbm [resolvable:$true] %s133
          %s135 = sshll.u32 %s126, 4
          %s136 = int_to_ptr.vmem [resolvable:$true] %s135
          %138 = dma.hbm_to_vmem [thread:$0]  %s134, 256, %s136, %s123
        $region24: #{tpu_custom_call.1} parent=19 // pred_fallthru
          _
      $region20: #{tpu_custom_call.1} parent=5 // pred_fallthru
        _
      %p139 = scmp.le.s32.totalorder 1, %s15
      %p140 = scmp.lt.s32.totalorder %s15, 3
      %p141 = pnand %p139, %p140
      %p142 = pneg %p141
      // Predicated region
      $region25: #{tpu_custom_call.1} parent=5 // pred_check
        _
      $region26: #{tpu_custom_call.1} parent=5 // pred_check_branch
        %144 = sbr.rel (%p141) target = $region28
      $region27: #{tpu_custom_call.1} parent=5 // pred_region
        %s145 = ssub.s32 %s15, 1
        %s146 = sand.u32 %s28, 1
        %s147 = scalar_lea.sflag [#allocation3], %s146
        %s148 = sand.u32 %s28, 1
        %s149 = smul.addr %s148, 16
        %s150 = scalar_lea.vmem [#allocation2], %s149
        // Predicated region
        $region29: #{tpu_custom_call.1} parent=27 // pred_check
          %p151 = pneg %p41
        $region30: #{tpu_custom_call.1} parent=27 // pred_check_branch
          %153 = sbr.rel (%p151) target = $region32
        $region31: #{tpu_custom_call.1} parent=27 // pred_region
          %155 = dma.done %s147, 256
        $region32: #{tpu_custom_call.1} parent=27 // pred_fallthru
          _
        // Predicated region
        $region33: #{tpu_custom_call.1} parent=27 // pred_check
          %p156 = pneg %p62
        $region34: #{tpu_custom_call.1} parent=27 // pred_check_branch
          %158 = sbr.rel (%p156) target = $region36
        $region35: #{tpu_custom_call.1} parent=27 // pred_region
          %160 = dma.done [#allocation6], 32
        $region36: #{tpu_custom_call.1} parent=27 // pred_fallthru
          _
        %s161 = sand.u32 %s28, 1
        %s162 = scalar_lea.sflag [#allocation3], %s161
        %s163 = sand.u32 %s28, 1
        %s164 = smul.addr %s163, 16
        %s165 = scalar_lea.vmem [#allocation2], %s164
        %p166 = pneg %p41
        %p167 = pneg %p38
        %p168 = pneg %p62
        %p169 = pneg %p59
        %p170 = pneg %p88
        %p171 = pneg %p85
        %s172 = sand.u32 %s75, 1
        %s173 = scalar_lea.sflag [#allocation4], %s172
        %s174 = sand.u32 %s75, 1
        %s175 = smul.addr %s174, 16
        %s176 = scalar_lea.vmem [#allocation7], %s175
        %v177 = vld [vmem:[%s150] sm:$0xff]
        %v178 = vld [vmem:[%s150 + $0x8] sm:$0xff]
        %v179 = vmul.f32 %v177, %v177
        %v180 = vmul.f32 %v178, %v178
        %v181 = vadd.f32 %v179, %v180
        %182 = vadd.xlane.f32.xlu0 %v181
        %v183 = vpop.xlane.xlu0 %182
        %v184 = vmul.f32 %v183, 0.00390625
        %v185 = vadd.f32 %v184, 1e-06
        %v186 = vrsqrt.pop %v185
        %v187 = vmul.f32 %v186, %v185
        %v188 = vmul.f32 %v187, %v186
        %v189 = vmul.f32 0.5, %v188
        %v190 = vsub.f32 1.5, %v189
        %v191 = vmul.f32 %v186, %v190
        %vm192 = vweird.f32 %v185
        %vm193 = vweird.f32 %v186
        %vm194 = vmor %vm192, %vm193
        %v195 = vsel %vm194, %v186, %v191
        %v196 = vmul.f32 %v177, %v195
        %v197 = vmul.f32 %v178, %v195
        %v198 = vld [vmem:[#allocation5] sm:$0x3]
        %v200 = vperm.slane %v198, 0
        %v201 = vperm.slane %v198, 1
        %v204 = vmul.f32 %v196, %v200
        %v205 = vmul.f32 %v197, %v201
        %206 = vst [vmem:[%s176] sm:$0xff] %v204
        %207 = vst [vmem:[%s176 + $0x8] sm:$0xff] %v205
        %s208 = sand.u32 %s75, 1
        %s209 = scalar_lea.sflag [#allocation4], %s208
        %s210 = sand.u32 %s75, 1
        %s211 = smul.addr %s210, 16
        %s212 = scalar_lea.vmem [#allocation7], %s211
        // Predicated region
        $region37: #{tpu_custom_call.1} parent=27 // pred_check
          %p213 = pneg %p85
        $region38: #{tpu_custom_call.1} parent=27 // pred_check_branch
          %215 = sbr.rel (%p213) target = $region40
        $region39: #{tpu_custom_call.1} parent=27 // pred_region
          %217 = vsyncadd %s209, 0
          %s218 = smul.addr %s20, 2
          %s219 = smul.addr %s218, 8
          %s220 = scalar_lea.hbm %s2, %s219
          %s222 = sshll.u32 %s212, 4
          %s223 = int_to_ptr.vmem [resolvable:$true] %s222
          %s224 = sshll.u32 %s220, 4
          %s225 = int_to_ptr.hbm [resolvable:$true] %s224
          %227 = dma.vmem_to_hbm [thread:$0]  %s223, 256, %s225, %s209
        $region40: #{tpu_custom_call.1} parent=27 // pred_fallthru
          _
      $region28: #{tpu_custom_call.1} parent=5 // pred_fallthru
        _
      %p228 = scmp.le.s32.totalorder 2, %s15
      // Predicated region
      $region41: #{tpu_custom_call.1} parent=5 // pred_check
        %p229 = pneg %p228
      $region42: #{tpu_custom_call.1} parent=5 // pred_check_branch
        %231 = sbr.rel (%p229) target = $region44
      $region43: #{tpu_custom_call.1} parent=5 // pred_region
        %s232 = ssub.s32 %s15, 2
        // Predicated region
        $region45: #{tpu_custom_call.1} parent=43 // pred_check
          %p233 = pneg %p91
        $region46: #{tpu_custom_call.1} parent=43 // pred_check_branch
          %235 = sbr.rel (%p233) target = $region48
        $region47: #{tpu_custom_call.1} parent=43 // pred_region
          %s236 = sand.u32 %s76, 1
          %s237 = scalar_lea.sflag [#allocation4], %s236
          %s238 = sand.u32 %s76, 1
          %s239 = smul.addr %s238, 16
          %s240 = scalar_lea.vmem [#allocation7], %s239
          %242 = dma.done %s237, 256
        $region48: #{tpu_custom_call.1} parent=43 // pred_fallthru
          _
      $region44: #{tpu_custom_call.1} parent=5 // pred_fallthru
        _
    $region6: #{tpu_custom_call.1} parent=1 // loop_footer
      %s19 = sadd.s32 1, %s15
    $region7: #{tpu_custom_call.1} parent=1 // loop_footer_branch
      %14 = sbr.rel target = $region3
    $region8: #{tpu_custom_call.1} parent=1 // loop_exit
      _
    %243 = vsyncpa [#allocation3], 1
    %s244 = scalar_lea.sflag [#allocation3], 1
    %245 = vsyncpa %s244, 1
    %246 = vsyncpa [#allocation6], 1
    %247 = vsyncpa [#allocation4], 1
    %s248 = scalar_lea.sflag [#allocation4], 1
    %249 = vsyncpa %s248, 1

</llo_original>
